<compile_context>
chip_gen: v6e
topology: v6e:2x2x1
jax: 0.10.0
libtpu: 0.0.40
codegen_flags: <defaults>
</compile_context>

<pallas_src>
import functools

import jax
import jax.numpy as jnp
from jax.experimental import pallas as pl
from jax.experimental.pallas import tpu as pltpu

LN_EPS = 1e-5     # torch.nn.LayerNorm default eps (used for z)
MOD_EPS = 1e-12   # ModifiedLayerNorm self.eps (used for zp)
STAB = 1e-6       # stabilize() constant


# --------------------------------------------------------------------------
# Kernel
# --------------------------------------------------------------------------
def _mln_kernel(x_ref, w_ref, b_ref, o_ref, *, h_real, exact, use_mxu):
    # x_ref: (TM, Hp); w_ref/b_ref: (1, Hp); o_ref: (TM, Hp).  Hp = round_up(H,128);
    # padded input lanes are zero, padded output lanes are discarded by the wrapper.
    x = x_ref[...].astype(jnp.float32)
    w = w_ref[...].astype(jnp.float32)
    b = b_ref[...].astype(jnp.float32)
    h_pad = x_ref.shape[-1]
    padded = h_pad != h_real
    inv_h = jnp.float32(1.0 / h_real)

    if use_mxu:
        # Row reductions on the (otherwise idle) MXU: dot with a ones column.
        # Masked ones column both sums and excludes padded lanes.
        if padded:
            lane = jax.lax.broadcasted_iota(jnp.int32, (h_pad, 1), 0)
            ones_col = (lane < h_real).astype(jnp.float32)
        else:
            ones_col = jnp.ones((h_pad, 1), jnp.float32)
        mean = jnp.dot(x, ones_col, preferred_element_type=jnp.float32) * inv_h
        xc = x - mean
        # Two-pass (center-first) variance: no E[x^2]-mean^2 cancellation.
        var = jnp.dot(xc * xc, ones_col, preferred_element_type=jnp.float32) * inv_h
    else:
        # VPU/XLU path (fine on v5e/v6e where the kernel is strictly HBM-bound).
        mean = jnp.sum(x, axis=-1, keepdims=True) * inv_h  # padded lanes are 0
        xc = x - mean
        xc2 = xc * xc
        if padded:
            lane = jax.lax.broadcasted_iota(jnp.int32, (1, h_pad), 1)
            xc2 = jnp.where(lane < h_real, xc2, 0.0)
        var = jnp.sum(xc2, axis=-1, keepdims=True) * inv_h

    # z: the actual LayerNorm output (norm_layer eps); rsqrt -> no per-elem divide.
    z = xc * jax.lax.rsqrt(var + LN_EPS) * w + b

    if exact:
        # Debug-only literal zp * (z / zp) of the PyTorch forward (zp only
        # matters for gradients; this path is compute-heavy for zero value).
        zp = xc * jax.lax.rsqrt(var + MOD_EPS) * w + b
        zp = zp + ((zp == 0.0).astype(jnp.float32) + jnp.sign(zp)) * STAB
        out = zp * (z / zp)
    else:
        out = z   # zp * (z / zp) == z in the forward pass
    o_ref[...] = out.astype(o_ref.dtype)


# --------------------------------------------------------------------------
# Tiling / hardware helpers
# --------------------------------------------------------------------------
def _round_up(n, m):
    return ((n + m - 1) // m) * m


def _sublane(dtype):
    # Native sublane tile: 8 for 4-byte, 16 for 2-byte, 32 for 1-byte dtypes.
    return max(8, 32 // jnp.dtype(dtype).itemsize)


def _default_vmem_limit():
    """Generation-aware scoped-VMEM limit (bytes)."""
    cap = None
    try:
        cap = int(pltpu.get_tpu_info().vmem_capacity_bytes)
    except Exception:
        cap = None
    if not cap or cap <= 0:
        return 32 * 1024 * 1024                 # safe everywhere (even v7x's 64 MiB)
    if cap >= 128 * 1024 * 1024:                # v5e/v6e: 128 MiB physical
        return 96 * 1024 * 1024
    return min(48 * 1024 * 1024, (cap * 3) // 4)   # v7x: 64 MiB physical -> ~48 MiB


def _is_v7_chip():
    try:
        return "v7" in jax.devices()[0].device_kind.lower()
    except Exception:
        return False


def _auto_row_tile(rows, h_pad, x_dtype, out_dtype, vmem_limit_bytes, exact):
    """Largest sublane-aligned row tile whose pipeline + in-kernel f32 temporaries
    fit comfortably in the scoped-VMEM budget, with a bytes-based cap and a
    >=4-grid-step guarantee (so v7x's second TensorCore gets work)."""
    sub = _sublane(x_dtype)
    in_b = jnp.dtype(x_dtype).itemsize
    out_b = jnp.dtype(out_dtype).itemsize
    # Double-buffered in/out pipeline + Mosaic-internal f32 temps (x, xc, z, ...).
    n_temps = 6 if exact else 4
    per_row = 2 * h_pad * (in_b + out_b) + n_temps * h_pad * 4
    budget = (vmem_limit_bytes * 5) // 8
    tile = budget // max(per_row, 1)
    # Bytes-based cap: aim for ~8 MiB input blocks, never cap below 1024 rows.
    target_block_bytes = 8 * 1024 * 1024
    cap = max(1024, target_block_bytes // max(h_pad * in_b, 1))
    tile = min(tile, cap)
    # Guarantee >=4 grid steps when there are enough rows (megacore split on v7x).
    if rows >= 4 * sub:
        tile = min(tile, _round_up((rows + 3) // 4, sub))
    tile = min(tile, _round_up(rows, sub))        # never larger than (padded) input
    tile = max(sub, (tile // sub) * sub)          # sublane-aligned -> unmasked stores
    return int(tile)


# --------------------------------------------------------------------------
# Wrapper
# --------------------------------------------------------------------------
@functools.partial(
    jax.jit,
    static_argnames=("row_tile", "exact", "vmem_limit_bytes", "use_mxu_reduce"))
def _mln_call(x, weight, bias, *, row_tile, exact, vmem_limit_bytes, use_mxu_reduce):
    orig_shape = x.shape
    H = orig_shape[-1]
    rows = 1
    for d in orig_shape[:-1]:
        rows *= d

    x2 = x.reshape(rows, H)
    w2 = weight.reshape(1, H)
    b2 = bias.reshape(1, H)

    # Lane-dense blocks: pad H to a multiple of 128 (weight->1, bias/x->0);
    # kernel masks the stats to the real H, wrapper slices the output back.
    H_pad = _round_up(H, 128)
    if H_pad != H:
        x2 = jnp.pad(x2, ((0, 0), (0, H_pad - H)))
        w2 = jnp.pad(w2, ((0, 0), (0, H_pad - H)), constant_values=1.0)
        b2 = jnp.pad(b2, ((0, 0), (0, H_pad - H)))

    if row_tile is None:
        row_tile = _auto_row_tile(rows, H_pad, x.dtype, x.dtype,
                                  vmem_limit_bytes, exact)
    else:
        sub = _sublane(x.dtype)
        row_tile = max(sub, (int(row_tile) // sub) * sub)

    # Ragged row counts: pl.cdiv grid + Pallas boundary masking (each output row
    # depends only on its own input row, so padded boundary rows are inert).
    grid = (pl.cdiv(rows, row_tile),)

    kernel = functools.partial(_mln_kernel, h_real=H, exact=exact,
                               use_mxu=use_mxu_reduce)

    in_b = jnp.dtype(x.dtype).itemsize
    cost = pl.CostEstimate(
        flops=(10 if exact else 7) * rows * H,
        transcendentals=2 * rows,                              # rsqrt per row
        bytes_accessed=rows * H_pad * 2 * in_b + 2 * H_pad * 4)

    out = pl.pallas_call(
        kernel,
        out_shape=jax.ShapeDtypeStruct((rows, H_pad), x.dtype),
        grid_spec=pltpu.PrefetchScalarGridSpec(
            num_scalar_prefetch=0,
            grid=grid,
            in_specs=[
                pl.BlockSpec((row_tile, H_pad), lambda i: (i, 0)),  # x tile
                pl.BlockSpec((1, H_pad), lambda i: (0, 0)),         # weight (resident)
                pl.BlockSpec((1, H_pad), lambda i: (0, 0)),         # bias (resident)
            ],
            out_specs=pl.BlockSpec((row_tile, H_pad), lambda i: (i, 0)),
        ),
        compiler_params=pltpu.CompilerParams(
            dimension_semantics=("parallel",),   # lets v7x's 2nd TC take half the grid
            vmem_limit_bytes=vmem_limit_bytes,   # generation-aware scoped-VMEM limit
        ),
        cost_estimate=cost,
    )(x2, w2, b2)

    if H_pad != H:
        out = out[:, :H]
    return out.reshape(orig_shape)


def modified_layer_norm(x, weight, bias, *, row_tile=None, exact=False,
                        vmem_limit_bytes=None, use_mxu_reduce=None):
    """x: (..., H); weight, bias: (H,).  Returns same shape/dtype as x."""
    if vmem_limit_bytes is None:
        vmem_limit_bytes = _default_vmem_limit()
    if use_mxu_reduce is None:
        # v7x: offload row reductions to the idle MXU (frees VALU/XLU slots);
        # v5e/v6e are strictly HBM-bound, keep the plain VPU reductions.
        use_mxu_reduce = _is_v7_chip()
    return _mln_call(x, weight, bias, row_tile=row_tile, exact=bool(exact),
                     vmem_limit_bytes=int(vmem_limit_bytes),
                     use_mxu_reduce=bool(use_mxu_reduce))


# --------------------------------------------------------------------------
# Pure-JAX reference (transcription of the PyTorch forward)
# --------------------------------------------------------------------------
def _reference(x, weight, bias):
    xf = x.astype(jnp.float32)
    w = weight.astype(jnp.float32)
    b = bias.astype(jnp.float32)
    mean = jnp.mean(xf, axis=-1, keepdims=True)
    var = jnp.mean((xf - mean) ** 2, axis=-1, keepdims=True)
    z = (xf - mean) / jnp.sqrt(var + LN_EPS) * w + b
    zp = (xf - mean) / jnp.sqrt(var + MOD_EPS) * w + b
    zp = zp + ((zp == 0.0).astype(jnp.float32) + jnp.sign(zp)) * STAB
    return (zp * (z / zp)).astype(x.dtype)


if __name__ == "__main__":
    key = jax.random.PRNGKey(0)
    kx, kw, kb, kx2, kx3, kw3, kb3 = jax.random.split(key, 7)

    # Primary shape: [batch, seq, hidden], LayerNorm over hidden (H=32 -> padded to 128).
    B, S, H = 2, 8, 32
    x = jax.random.normal(kx, (B, S, H), dtype=jnp.float32)
    weight = 1.0 + 0.1 * jax.random.normal(kw, (H,), dtype=jnp.float32)
    bias = 0.1 * jax.random.normal(kb, (H,), dtype=jnp.float32)

    ref = _reference(x, weight, bias)

    # Default (fast) path: forward value == z == zp * (z / zp).
    out = jax.block_until_ready(modified_layer_norm(x, weight, bias))
    assert out.shape == x.shape and out.dtype == x.dtype
    assert jnp.allclose(out, ref, atol=1e-5, rtol=1e-5), "fast path mismatch"

    # MXU-reduction path (auto-selected on v7x; force it here to validate on any chip).
    out_mxu = jax.block_until_ready(
        modified_layer_norm(x, weight, bias, use_mxu_reduce=True))
    assert jnp.allclose(out_mxu, ref, atol=1e-5, rtol=1e-5), "mxu-reduce mismatch"

    # Literal zp * (z / zp) data path (debug-only).
    out_exact = jax.block_until_ready(modified_layer_norm(x, weight, bias, exact=True))
    assert jnp.allclose(out_exact, ref, atol=1e-5, rtol=1e-5), "exact path mismatch"

    # Ragged row count (rows=15, tile=8) exercises pl.cdiv grid + boundary masking.
    x_r = jax.random.normal(kx2, (3, 5, H), dtype=jnp.float32)
    out_r = jax.block_until_ready(modified_layer_norm(x_r, weight, bias, row_tile=8))
    assert jnp.allclose(out_r, _reference(x_r, weight, bias),
                        atol=1e-5, rtol=1e-5), "ragged-rows mismatch"

    # H already lane-dense (H=128): exercises the no-padding branch.
    H2 = 128
    x3 = jax.random.normal(kx3, (4, H2), dtype=jnp.float32)
    w3 = 1.0 + 0.1 * jax.random.normal(kw3, (H2,), dtype=jnp.float32)
    b3 = 0.1 * jax.random.normal(kb3, (H2,), dtype=jnp.float32)
    out3 = jax.block_until_ready(modified_layer_norm(x3, w3, b3))
    assert jnp.allclose(out3, _reference(x3, w3, b3),
                        atol=1e-5, rtol=1e-5), "lane-dense H mismatch"

    print("KERNEL_OK")
</pallas_src>

<mosaic_0001>
module attributes {stable_mosaic.version = 11 : i64} {
  func.func @_mln_kernel(%arg0: i32, %arg1: memref<16x128xf32, #tpu.memory_space<vmem>>, %arg2: memref<1x128xf32, #tpu.memory_space<vmem>>, %arg3: memref<1x128xf32, #tpu.memory_space<vmem>>, %arg4: memref<16x128xf32, #tpu.memory_space<vmem>>) attributes {dimension_semantics = [#tpu.dimension_semantics<parallel>], iteration_bounds = array<i64: 1>, scalar_prefetch = 0 : i64, scratch_operands = 0 : i64, tpu.core_type = #tpu.core_type<tc>, window_params = [{transform_indices = @transform_0, window_bounds = array<i64: 16, 128>}, {pipeline_mode = #tpu.pipeline_mode<synchronous>, transform_indices = @transform_1, window_bounds = array<i64: 1, 128>}, {pipeline_mode = #tpu.pipeline_mode<synchronous>, transform_indices = @transform_2, window_bounds = array<i64: 1, 128>}, {transform_indices = @transform_3, window_bounds = array<i64: 16, 128>}]} {
    %c0 = arith.constant 0 : index
    %c0_0 = arith.constant 0 : index
    %0 = vector.load %arg1[%c0, %c0_0] : memref<16x128xf32, #tpu.memory_space<vmem>>, vector<16x128xf32>
    %c0_1 = arith.constant 0 : index
    %c0_2 = arith.constant 0 : index
    %1 = vector.load %arg2[%c0_1, %c0_2] : memref<1x128xf32, #tpu.memory_space<vmem>>, vector<1x128xf32>
    %c0_3 = arith.constant 0 : index
    %c0_4 = arith.constant 0 : index
    %2 = vector.load %arg3[%c0_3, %c0_4] : memref<1x128xf32, #tpu.memory_space<vmem>>, vector<1x128xf32>
    %cst = arith.constant dense<0.000000e+00> : vector<16xf32>
    %3 = vector.multi_reduction <add>, %0, %cst [1] : vector<16x128xf32> to vector<16xf32>
    %4 = vector.shape_cast %3 : vector<16xf32> to vector<16x1xf32>
    %cst_5 = arith.constant 3.125000e-02 : f32
    %5 = vector.broadcast %cst_5 : f32 to vector<16x1xf32>
    %6 = arith.mulf %4, %5 : vector<16x1xf32>
    %7 = vector.broadcast %6 : vector<16x1xf32> to vector<16x128xf32>
    %8 = arith.subf %0, %7 : vector<16x128xf32>
    %9 = arith.mulf %8, %8 : vector<16x128xf32>
    %10 = tpu.iota {dimensions = array<i32: 1>} : vector<1x128xi32>
    %c32_i32 = arith.constant 32 : i32
    %11 = vector.broadcast %c32_i32 : i32 to vector<1x128xi32>
    %12 = arith.cmpi slt, %10, %11 : vector<1x128xi32>
    %cst_6 = arith.constant 0.000000e+00 : f32
    %13 = vector.shape_cast %12 : vector<1x128xi1> to vector<1x128xi1>
    %14 = vector.broadcast %13 : vector<1x128xi1> to vector<16x128xi1>
    %15 = vector.broadcast %cst_6 : f32 to vector<16x128xf32>
    %16 = arith.select %14, %9, %15 : vector<16x128xi1>, vector<16x128xf32>
    %cst_7 = arith.constant dense<0.000000e+00> : vector<16xf32>
    %17 = vector.multi_reduction <add>, %16, %cst_7 [1] : vector<16x128xf32> to vector<16xf32>
    %18 = vector.shape_cast %17 : vector<16xf32> to vector<16x1xf32>
    %cst_8 = arith.constant 3.125000e-02 : f32
    %19 = vector.broadcast %cst_8 : f32 to vector<16x1xf32>
    %20 = arith.mulf %18, %19 : vector<16x1xf32>
    %cst_9 = arith.constant 9.99999974E-6 : f32
    %21 = vector.broadcast %cst_9 : f32 to vector<16x1xf32>
    %22 = arith.addf %20, %21 : vector<16x1xf32>
    %23 = math.rsqrt %22 : vector<16x1xf32>
    %24 = vector.broadcast %23 : vector<16x1xf32> to vector<16x128xf32>
    %25 = arith.mulf %8, %24 : vector<16x128xf32>
    %26 = vector.broadcast %1 : vector<1x128xf32> to vector<16x128xf32>
    %27 = arith.mulf %25, %26 : vector<16x128xf32>
    %28 = vector.broadcast %2 : vector<1x128xf32> to vector<16x128xf32>
    %29 = arith.addf %27, %28 : vector<16x128xf32>
    %c0_10 = arith.constant 0 : index
    %c0_11 = arith.constant 0 : index
    %30 = vector.load %arg4[%c0_10, %c0_11] : memref<16x128xf32, #tpu.memory_space<vmem>>, vector<16x128xf32>
    tpu.vector_store %arg4[%c0_10, %c0_11], %29 {strides = array<i32>} : memref<16x128xf32, #tpu.memory_space<vmem>>, vector<16x128xf32>,
    return
  }
  func.func @transform_0(%arg0: i32) -> (i32, i32) {
    %c0_i32 = arith.constant 0 : i32
    %c0_i32_0 = arith.constant 0 : i32
    return %arg0, %c0_i32 : i32, i32
  }
  func.func @transform_1(%arg0: i32) -> (i32, i32) {
    %c0_i32 = arith.constant 0 : i32
    %c0_i32_0 = arith.constant 0 : i32
    %c0_i32_1 = arith.constant 0 : i32
    return %c0_i32, %c0_i32_0 : i32, i32
  }
  func.func @transform_2(%arg0: i32) -> (i32, i32) {
    %c0_i32 = arith.constant 0 : i32
    %c0_i32_0 = arith.constant 0 : i32
    %c0_i32_1 = arith.constant 0 : i32
    return %c0_i32, %c0_i32_0 : i32, i32
  }
  func.func @transform_3(%arg0: i32) -> (i32, i32) {
    %c0_i32 = arith.constant 0 : i32
    %c0_i32_0 = arith.constant 0 : i32
    return %arg0, %c0_i32 : i32, i32
  }
}

</mosaic_0001>

<llo_original>
// kernel: _mln_call.1
$region0: #{_mln_call.1}
  #allocation0 [shape = 'u32[]', space=smem, size = 0x4, offset = 0x4, fixed_abs, tag = 'smem constant byte address 0x4 - core index']
  #allocation1 [shape = 'u32[144,128]{1,0:T(1,128)}', space=vmem, size = 0x12000, scoped, tag = 'internal scratch']
  %s0 = inlined_call_operand.vmem [shape: f32[16,128], index: 0, kind: input, shape index: {}]
  %s1 = inlined_call_operand.vmem [shape: f32[1,128], index: 1, kind: input, shape index: {}]
  %s2 = inlined_call_operand.vmem [shape: f32[1,128], index: 2, kind: input, shape index: {}]
  %s3 = inlined_call_operand.vmem [shape: f32[16,128], index: 3, kind: output, shape index: {}]
  %s4 = sld [smem:[#allocation0]]
  $region22: #{_mln_call.1} parent=0
    _
  %s6 = ssub.s32 1, %s4
  %s7 = scalar_select 0, %s6, %s4
  // Predicated region
  $region2: #{_mln_call.1} parent=0 // pred_check
    _
  $region3: #{_mln_call.1} parent=0 // pred_check_branch
    %9 = sbr.rel (0) target = $region5
  $region4: #{_mln_call.1} parent=0 // pred_region
    _
  $region5: #{_mln_call.1} parent=0 // pred_fallthru
    _
  // Predicated region
  $region6: #{_mln_call.1} parent=0 // pred_check
    _
  $region7: #{_mln_call.1} parent=0 // pred_check_branch
    %11 = sbr.rel (0) target = $region9
  $region8: #{_mln_call.1} parent=0 // pred_region
    _
  $region9: #{_mln_call.1} parent=0 // pred_fallthru
    _
  // Predicated region
  $region10: #{_mln_call.1} parent=0 // pred_check
    _
  $region11: #{_mln_call.1} parent=0 // pred_check_branch
    %13 = sbr.rel (0) target = $region13
  $region12: #{_mln_call.1} parent=0 // pred_region
    _
  $region13: #{_mln_call.1} parent=0 // pred_fallthru
    _
  %v14 = vld [vmem:[%s0] sm:$0xff]
  %v15 = vld [vmem:[%s0 + $0x8] sm:$0xff]
  %v16 = vld [vmem:[%s1] sm:$0x1]
  %v17 = vld [vmem:[%s2] sm:$0x1]
  %18 = vadd.xlane.f32.xlu0 %v14
  %v19 = vpop.xlane.xlu0 %18
  %20 = vadd.xlane.f32.xlu0 %v15
  %v21 = vpop.xlane.xlu0 %20
  %v22 = vmul.f32 %v19, 0.03125
  %v23 = vmul.f32 %v21, 0.03125
  %v24 = vsub.f32 %v14, %v22
  %v25 = vsub.f32 %v15, %v23
  %v26 = vmul.f32 %v24, %v24
  %v27 = vmul.f32 %v25, %v25
  %v28 = vlaneseq
  %v29 = vand.u32 %v28, 127
  %vm30 = vcmp.lt.s32.totalorder %v29, 32
  %v31 = vsel %vm30, 1, 0
  %vm32 = vcmp.eq.s32.totalorder %v31, 1
  %v33 = vsel %vm32, %v26, 0.0
  %v34 = vsel %vm32, %v27, 0.0
  %35 = vadd.xlane.f32.xlu0 %v33
  %v36 = vpop.xlane.xlu0 %35
  %37 = vadd.xlane.f32.xlu0 %v34
  %v38 = vpop.xlane.xlu0 %37
  %v39 = vmul.f32 %v36, 0.03125
  %v40 = vmul.f32 %v38, 0.03125
  %v41 = vadd.f32 %v39, 1e-05
  %v42 = vadd.f32 %v40, 1e-05
  %v43 = vrsqrt.pop %v41
  %v44 = vrsqrt.pop %v42
  %v45 = vmul.f32 %v24, %v43
  %v46 = vmul.f32 %v25, %v44
  %v48 = vlaneseq
  %v49 = vshrl.u32 %v48, 7
  %v50 = vsub.s32 0, %v49
  %v51 = vrot.slane %v16, %v50
  %v53 = vmul.f32 %v45, %v51
  %v54 = vmul.f32 %v46, %v51
  %v56 = vlaneseq
  %v57 = vshrl.u32 %v56, 7
  %v58 = vsub.s32 0, %v57
  %v59 = vrot.slane %v17, %v58
  %v61 = vadd.f32 %v53, %v59
  %v62 = vadd.f32 %v54, %v59
  %63 = vst [vmem:[%s3] sm:$0xff] %v61
  %64 = vst [vmem:[%s3 + $0x8] sm:$0xff] %v62
  // Predicated region
  $region14: #{_mln_call.1} parent=0 // pred_check
    _
  $region15: #{_mln_call.1} parent=0 // pred_check_branch
    %66 = sbr.rel (0) target = $region17
  $region16: #{_mln_call.1} parent=0 // pred_region
    _
  $region17: #{_mln_call.1} parent=0 // pred_fallthru
    _
  // Predicated region
  $region18: #{_mln_call.1} parent=0 // pred_check
    _
  $region19: #{_mln_call.1} parent=0 // pred_check_branch
    %68 = sbr.rel (0) target = $region21
  $region20: #{_mln_call.1} parent=0 // pred_region
    _
  $region21: #{_mln_call.1} parent=0 // pred_fallthru
    _

</llo_original>
